<compile_context>
chip_gen: v7x
topology: tpu7x:2x2x1
jax: 0.10.0
libtpu: 0.0.40
codegen_flags: <defaults>
</compile_context>

<pallas_src>
import jax
import jax.numpy as jnp
from jax.experimental import pallas as pl
from jax.experimental.pallas import tpu as pltpu


def _round_up(x, m):
    return ((x + m - 1) // m) * m


def face_classifier_kernel(x_ref, w1_ref, b1_ref, w2t_ref, b2_ref, o_ref):
    # Hidden layer on the MXU: bf16 inputs, f32 accumulation.
    h = jnp.dot(x_ref[...], w1_ref[...], preferred_element_type=jnp.float32)
    h = jnp.maximum(h + b1_ref[...], 0.0)                      # bias + ReLU (VPU)
    # Output layer as elementwise multiply (VPU) + lane reduction (XLU):
    # (TM, 128) * (1, 128) -> sum over lanes -> (TM, 1).
    logit = jnp.sum(h * w2t_ref[...], axis=-1, keepdims=True) + b2_ref[0, 0]
    o_ref[...] = jax.nn.sigmoid(logit).astype(o_ref.dtype)     # sigmoid (EUP)


def face_classifier(x, w1, b1, w2, b2, *, block_rows=512):
    """x: (B, D) f32; w1: (D, H); b1: (1, H); w2: (H, 1); b2: (1, 1) -> (B, 1) f32."""
    B, D = x.shape
    H = w1.shape[1]

    # Batch tile: multiple of 8 sublanes, capped at block_rows (sized so
    # 2 x TM x D x 2B of double-buffered bf16 x plus ~160 KiB resident weights
    # fits comfortably inside v7x's 64 MiB / default scoped VMEM).
    tm = min(block_rows, _round_up(B, 8))
    padded_b = _round_up(B, tm)
    if padded_b != B:
        x = jnp.pad(x, ((0, padded_b - B), (0, 0)))

    # bf16 for the MXU-native path + half the HBM bytes per row.
    x_bf = x.astype(jnp.bfloat16)
    w1_bf = w1.astype(jnp.bfloat16)
    # Keep the post-matmul elementwise math in f32 (bias, ReLU, reduce, sigmoid).
    b1_f = b1.reshape(1, H).astype(jnp.float32)
    w2t = w2.reshape(1, H).astype(jnp.float32)      # pre-transposed second layer
    b2_s = b2.reshape(1, 1).astype(jnp.float32)

    grid = (padded_b // tm,)
    out = pl.pallas_call(
        face_classifier_kernel,
        out_shape=jax.ShapeDtypeStruct((padded_b, 1), jnp.float32),
        grid_spec=pltpu.PrefetchScalarGridSpec(
            num_scalar_prefetch=0,
            grid=grid,
            in_specs=[
                pl.BlockSpec((tm, D), lambda i: (i, 0)),   # x: streamed batch tiles
                pl.BlockSpec((D, H), lambda i: (0, 0)),    # w1: VMEM-resident
                pl.BlockSpec((1, H), lambda i: (0, 0)),    # b1: VMEM-resident
                pl.BlockSpec((1, H), lambda i: (0, 0)),    # w2^T: VMEM-resident
                pl.BlockSpec(memory_space=pltpu.SMEM),     # b2: scalar in SMEM
            ],
            out_specs=pl.BlockSpec((tm, 1), lambda i: (i, 0)),
        ),
        compiler_params=pltpu.CompilerParams(
            dimension_semantics=("parallel",),
        ),
    )(x_bf, w1_bf, b1_f, w2t, b2_s)
    return out[:B]


def face_classifier_ref(x, w1, b1, w2, b2):
    """Plain-JAX reference (f32) matching the PyTorch module."""
    h = jnp.maximum(x @ w1 + b1.reshape(1, -1), 0.0)
    return jax.nn.sigmoid(h @ w2 + b2.reshape(1, 1))


def init_params(key, input_dim=512, hidden_dim=128, out_dim=1):
    """PyTorch-default-like Linear init (uniform +-1/sqrt(fan_in)).
    Weights stored pre-transposed as (in_features, out_features)."""
    k1, k2, k3, k4 = jax.random.split(key, 4)
    bound1 = 1.0 / jnp.sqrt(jnp.float32(input_dim))
    bound2 = 1.0 / jnp.sqrt(jnp.float32(hidden_dim))
    w1 = jax.random.uniform(k1, (input_dim, hidden_dim), jnp.float32, -bound1, bound1)
    b1 = jax.random.uniform(k2, (1, hidden_dim), jnp.float32, -bound1, bound1)
    w2 = jax.random.uniform(k3, (hidden_dim, out_dim), jnp.float32, -bound2, bound2)
    b2 = jax.random.uniform(k4, (1, out_dim), jnp.float32, -bound2, bound2)
    return w1, b1, w2, b2


if __name__ == "__main__":
    key = jax.random.PRNGKey(0)
    kx, kx2, kp = jax.random.split(key, 3)

    D = 512
    w1, b1, w2, b2 = init_params(kp, input_dim=D)

    # Small, tile-aligned batch.
    B = 8
    x = jax.random.normal(kx, (B, D), jnp.float32)
    out = jax.block_until_ready(face_classifier(x, w1, b1, w2, b2))
    ref = face_classifier_ref(x, w1, b1, w2, b2)
    assert out.shape == (B, 1)
    # bf16 inputs -> loosen tolerance (sigmoid outputs live in (0, 1)).
    assert jnp.allclose(out, ref, atol=1e-2, rtol=1e-2)

    # Ragged batch (exercises the padding path).
    B2 = 10
    x2 = jax.random.normal(kx2, (B2, D), jnp.float32)
    out2 = jax.block_until_ready(face_classifier(x2, w1, b1, w2, b2))
    ref2 = face_classifier_ref(x2, w1, b1, w2, b2)
    assert out2.shape == (B2, 1)
    assert jnp.allclose(out2, ref2, atol=1e-2, rtol=1e-2)

    print("KERNEL_OK")
</pallas_src>

<mosaic_0001>
module attributes {stable_mosaic.version = 11 : i64} {
  func.func @face_classifier_kernel(%arg0: i32, %arg1: memref<8x512xbf16, #tpu.memory_space<vmem>>, %arg2: memref<512x128xbf16, #tpu.memory_space<vmem>>, %arg3: memref<1x128xf32, #tpu.memory_space<vmem>>, %arg4: memref<1x128xf32, #tpu.memory_space<vmem>>, %arg5: memref<1x1xf32, #tpu.memory_space<smem>>, %arg6: memref<8x1xf32, #tpu.memory_space<vmem>>) attributes {dimension_semantics = [#tpu.dimension_semantics<parallel>], iteration_bounds = array<i64: 1>, scalar_prefetch = 0 : i64, scratch_operands = 0 : i64, tpu.core_type = #tpu.core_type<tc>, window_params = [{transform_indices = @transform_0, window_bounds = array<i64: 8, 512>}, {pipeline_mode = #tpu.pipeline_mode<synchronous>, transform_indices = @transform_1, window_bounds = array<i64: 512, 128>}, {pipeline_mode = #tpu.pipeline_mode<synchronous>, transform_indices = @transform_2, window_bounds = array<i64: 1, 128>}, {pipeline_mode = #tpu.pipeline_mode<synchronous>, transform_indices = @transform_3, window_bounds = array<i64: 1, 128>}, {transform_indices = @transform_4, window_bounds = array<i64: 1, 1>}, {transform_indices = @transform_5, window_bounds = array<i64: 8, 1>}]} {
    %c0 = arith.constant 0 : index
    %c0_0 = arith.constant 0 : index
    %0 = vector.load %arg1[%c0, %c0_0] : memref<8x512xbf16, #tpu.memory_space<vmem>>, vector<8x512xbf16>
    %c0_1 = arith.constant 0 : index
    %c0_2 = arith.constant 0 : index
    %1 = vector.load %arg2[%c0_1, %c0_2] : memref<512x128xbf16, #tpu.memory_space<vmem>>, vector<512x128xbf16>
    %cst = arith.constant dense<0.000000e+00> : vector<8x128xf32>
    %2 = tpu.matmul %0, %1, %cst {dimension_numbers = #tpu.dot_dimension_numbers<[1], [0], [0], [1], [0, 0, 1, 1], [], []>} : vector<8x512xbf16>, vector<512x128xbf16>, vector<8x128xf32> -> vector<8x128xf32>
    %c0_3 = arith.constant 0 : index
    %c0_4 = arith.constant 0 : index
    %3 = vector.load %arg3[%c0_3, %c0_4] : memref<1x128xf32, #tpu.memory_space<vmem>>, vector<1x128xf32>
    %4 = vector.broadcast %3 : vector<1x128xf32> to vector<8x128xf32>
    %5 = arith.addf %2, %4 : vector<8x128xf32>
    %cst_5 = arith.constant 0.000000e+00 : f32
    %6 = vector.broadcast %cst_5 : f32 to vector<8x128xf32>
    %7 = arith.maximumf %5, %6 : vector<8x128xf32>
    %c0_6 = arith.constant 0 : index
    %c0_7 = arith.constant 0 : index
    %8 = vector.load %arg4[%c0_6, %c0_7] : memref<1x128xf32, #tpu.memory_space<vmem>>, vector<1x128xf32>
    %9 = vector.broadcast %8 : vector<1x128xf32> to vector<8x128xf32>
    %10 = arith.mulf %7, %9 : vector<8x128xf32>
    %cst_8 = arith.constant dense<0.000000e+00> : vector<8xf32>
    %11 = vector.multi_reduction <add>, %10, %cst_8 [1] : vector<8x128xf32> to vector<8xf32>
    %12 = vector.shape_cast %11 : vector<8xf32> to vector<8x1xf32>
    %c0_9 = arith.constant 0 : index
    %c0_10 = arith.constant 0 : index
    %13 = memref.load %arg5[%c0_9, %c0_10] : memref<1x1xf32, #tpu.memory_space<smem>>
    %14 = vector.broadcast %13 : f32 to vector<8x1xf32>
    %15 = arith.addf %12, %14 : vector<8x1xf32>
    %16 = arith.negf %15 : vector<8x1xf32>
    %17 = math.exp %16 : vector<8x1xf32>
    %cst_11 = arith.constant 1.000000e+00 : f32
    %18 = vector.broadcast %cst_11 : f32 to vector<8x1xf32>
    %19 = arith.addf %18, %17 : vector<8x1xf32>
    %20 = arith.divf %18, %19 : vector<8x1xf32>
    %c0_12 = arith.constant 0 : index
    %c0_13 = arith.constant 0 : index
    %21 = vector.load %arg6[%c0_12, %c0_13] : memref<8x1xf32, #tpu.memory_space<vmem>>, vector<8x1xf32>
    tpu.vector_store %arg6[%c0_12, %c0_13], %20 {strides = array<i32>} : memref<8x1xf32, #tpu.memory_space<vmem>>, vector<8x1xf32>,
    return
  }
  func.func @transform_0(%arg0: i32) -> (i32, i32) {
    %c0_i32 = arith.constant 0 : i32
    %c0_i32_0 = arith.constant 0 : i32
    return %arg0, %c0_i32 : i32, i32
  }
  func.func @transform_1(%arg0: i32) -> (i32, i32) {
    %c0_i32 = arith.constant 0 : i32
    %c0_i32_0 = arith.constant 0 : i32
    %c0_i32_1 = arith.constant 0 : i32
    return %c0_i32, %c0_i32_0 : i32, i32
  }
  func.func @transform_2(%arg0: i32) -> (i32, i32) {
    %c0_i32 = arith.constant 0 : i32
    %c0_i32_0 = arith.constant 0 : i32
    %c0_i32_1 = arith.constant 0 : i32
    return %c0_i32, %c0_i32_0 : i32, i32
  }
  func.func @transform_3(%arg0: i32) -> (i32, i32) {
    %c0_i32 = arith.constant 0 : i32
    %c0_i32_0 = arith.constant 0 : i32
    %c0_i32_1 = arith.constant 0 : i32
    return %c0_i32, %c0_i32_0 : i32, i32
  }
  func.func @transform_4(%arg0: i32) -> (i32, i32) {
    %c0_i32 = arith.constant 0 : i32
    %c0_i32_0 = arith.constant 0 : i32
    %c0_i32_1 = arith.constant 0 : i32
    return %c0_i32, %c0_i32_0 : i32, i32
  }
  func.func @transform_5(%arg0: i32) -> (i32, i32) {
    %c0_i32 = arith.constant 0 : i32
    %c0_i32_0 = arith.constant 0 : i32
    return %arg0, %c0_i32 : i32, i32
  }
}

</mosaic_0001>

<llo_original>
// kernel: tpu_custom_call.1
$region0: #{tpu_custom_call.1}
  #allocation0 [shape = 'u32[]', space=smem, size = 0x4, offset = 0x4, fixed_abs, tag = 'smem constant byte address 0x4 - core index']
  #allocation1 [shape = 'u32[144,128]{1,0:T(1,128)}', space=vmem, size = 0x12000, scoped, tag = 'internal scratch']
  #allocation2 [shape = 'f32[1,1]{1,0:T(1,128)S(6)}', space=smem, size = 0x200, scoped, tag = 'scoped memory for tpu_custom_call.1']
  %s0 = inlined_call_operand.hbm [shape: bf16[8,512], index: 0, kind: input, shape index: {}]
  %s1 = inlined_call_operand.hbm [shape: bf16[512,128], index: 1, kind: input, shape index: {}]
  %s2 = inlined_call_operand.vmem [shape: f32[1,128], index: 2, kind: input, shape index: {}]
  %s3 = inlined_call_operand.vmem [shape: f32[1,128], index: 3, kind: input, shape index: {}]
  %s4 = inlined_call_operand.<no memory space> [shape: f32[1,1], index: 4, kind: input, shape index: {}]
  %s5 = inlined_call_operand.vmem [shape: f32[8,1], index: 5, kind: output, shape index: {}]
  %s6 = sld [smem:[#allocation0]]
  $region38: #{tpu_custom_call.1} parent=0
    _
  %s8 = ssub.s32 1, %s6
  %s9 = scalar_select 0, %s8, %s6
  %10 = sst [smem:[#allocation2]] %s4
  $region1: #{tpu_custom_call.1} parent=0
    #allocation3 [shape = 'u8[8192]{0}', space=vmem, size = 0x2000, scoped, tag = 'input window, operand 0, single buffered']
    #allocation4 [shape = 's32[1]{0}', space=sflag, size = 0x4, scoped, tag = 'scoped memory for tpu_custom_call.1']
    #allocation5 [shape = 'u8[131072]{0}', space=vmem, size = 0x20000, scoped, tag = 'input window, operand 1, single buffered']
    #allocation6 [shape = 's32[1]{0}', space=sflag, size = 0x4, scoped, tag = 'scoped memory for tpu_custom_call.1']
    %11 = vsyncpa [#allocation4], 0
    %12 = vsyncpa [#allocation6], 0
    // Predicated region
    $region2: #{tpu_custom_call.1} parent=1 // pred_check
      _
    $region3: #{tpu_custom_call.1} parent=1 // pred_check_branch
      %14 = sbr.rel (0) target = $region5
    $region4: #{tpu_custom_call.1} parent=1 // pred_region
      %s16 = ssub.s32 256, 256
      %17 = vsyncadd [#allocation4], %s16
      %s19 = sshll.u32 [#allocation3], 4
      %s20 = int_to_ptr.vmem [resolvable:$true] %s19
      %22 = dma.hbm_to_vmem [thread:$0]  %s0, 256, %s20, [#allocation4]
    $region5: #{tpu_custom_call.1} parent=1 // pred_fallthru
      _
    // Predicated region
    $region6: #{tpu_custom_call.1} parent=1 // pred_check
      _
    $region7: #{tpu_custom_call.1} parent=1 // pred_check_branch
      %24 = sbr.rel (0) target = $region9
    $region8: #{tpu_custom_call.1} parent=1 // pred_region
      %s26 = ssub.s32 4096, 4096
      %27 = vsyncadd [#allocation6], %s26
      %s28 = sshll.u32 [#allocation5], 4
      %s29 = int_to_ptr.vmem [resolvable:$true] %s28
      %34 = dma.hbm_to_vmem [thread:$0]  %s1, 4096, %s29, [#allocation6], 64, 64, 4
    $region9: #{tpu_custom_call.1} parent=1 // pred_fallthru
      _
    // Predicated region
    $region10: #{tpu_custom_call.1} parent=1 // pred_check
      _
    $region11: #{tpu_custom_call.1} parent=1 // pred_check_branch
      %36 = sbr.rel (0) target = $region13
    $region12: #{tpu_custom_call.1} parent=1 // pred_region
      _
    $region13: #{tpu_custom_call.1} parent=1 // pred_fallthru
      _
    // Predicated region
    $region14: #{tpu_custom_call.1} parent=1 // pred_check
      _
    $region15: #{tpu_custom_call.1} parent=1 // pred_check_branch
      %38 = sbr.rel (0) target = $region17
    $region16: #{tpu_custom_call.1} parent=1 // pred_region
      _
    $region17: #{tpu_custom_call.1} parent=1 // pred_fallthru
      _
    // Predicated region
    $region18: #{tpu_custom_call.1} parent=1 // pred_check
      _
    $region19: #{tpu_custom_call.1} parent=1 // pred_check_branch
      %40 = sbr.rel (0) target = $region21
    $region20: #{tpu_custom_call.1} parent=1 // pred_region
      _
    $region21: #{tpu_custom_call.1} parent=1 // pred_fallthru
      _
    // Predicated region
    $region22: #{tpu_custom_call.1} parent=1 // pred_check
      _
    $region23: #{tpu_custom_call.1} parent=1 // pred_check_branch
      %42 = sbr.rel (0) target = $region25
    $region24: #{tpu_custom_call.1} parent=1 // pred_region
      %43 = dma.done [#allocation4], 256
    $region25: #{tpu_custom_call.1} parent=1 // pred_fallthru
      _
    // Predicated region
    $region26: #{tpu_custom_call.1} parent=1 // pred_check
      _
    $region27: #{tpu_custom_call.1} parent=1 // pred_check_branch
      %45 = sbr.rel (0) target = $region29
    $region28: #{tpu_custom_call.1} parent=1 // pred_region
      %46 = dma.done [#allocation6], 4096
    $region29: #{tpu_custom_call.1} parent=1 // pred_fallthru
      _
    %v48 = vld [vmem:[#allocation3] sm:$0xff]
    %v49 = vld [vmem:[#allocation3 + $0x8] sm:$0xff]
    %v50 = vld [vmem:[#allocation5] sm:$0xf]
    %v51 = vld [vmem:[#allocation5 + $0x4] sm:$0xf]
    %v52 = vld [vmem:[#allocation5 + $0x8] sm:$0xf]
    %v53 = vld [vmem:[#allocation5 + $0xc] sm:$0xf]
    %v54 = vld [vmem:[#allocation5 + $0x10] sm:$0xf]
    %v55 = vld [vmem:[#allocation5 + $0x14] sm:$0xf]
    %v56 = vld [vmem:[#allocation5 + $0x18] sm:$0xf]
    %v57 = vld [vmem:[#allocation5 + $0x1c] sm:$0xf]
    %v58 = vld [vmem:[#allocation5 + $0x20] sm:$0xf]
    %v59 = vld [vmem:[#allocation5 + $0x24] sm:$0xf]
    %v60 = vld [vmem:[#allocation5 + $0x28] sm:$0xf]
    %v61 = vld [vmem:[#allocation5 + $0x2c] sm:$0xf]
    %v62 = vld [vmem:[#allocation5 + $0x30] sm:$0xf]
    %v63 = vld [vmem:[#allocation5 + $0x34] sm:$0xf]
    %v64 = vld [vmem:[#allocation5 + $0x38] sm:$0xf]
    %v65 = vld [vmem:[#allocation5 + $0x3c] sm:$0xf]
    %v66 = vld [vmem:[#allocation5 + $0x40] sm:$0xf]
    %v67 = vld [vmem:[#allocation5 + $0x44] sm:$0xf]
    %v68 = vld [vmem:[#allocation5 + $0x48] sm:$0xf]
    %v69 = vld [vmem:[#allocation5 + $0x4c] sm:$0xf]
    %v70 = vld [vmem:[#allocation5 + $0x50] sm:$0xf]
    %v71 = vld [vmem:[#allocation5 + $0x54] sm:$0xf]
    %v72 = vld [vmem:[#allocation5 + $0x58] sm:$0xf]
    %v73 = vld [vmem:[#allocation5 + $0x5c] sm:$0xf]
    %v74 = vld [vmem:[#allocation5 + $0x60] sm:$0xf]
    %v75 = vld [vmem:[#allocation5 + $0x64] sm:$0xf]
    %v76 = vld [vmem:[#allocation5 + $0x68] sm:$0xf]
    %v77 = vld [vmem:[#allocation5 + $0x6c] sm:$0xf]
    %v78 = vld [vmem:[#allocation5 + $0x70] sm:$0xf]
    %v79 = vld [vmem:[#allocation5 + $0x74] sm:$0xf]
    %v80 = vld [vmem:[#allocation5 + $0x78] sm:$0xf]
    %v81 = vld [vmem:[#allocation5 + $0x7c] sm:$0xf]
    %v82 = vld [vmem:[#allocation5 + $0x80] sm:$0xf]
    %v83 = vld [vmem:[#allocation5 + $0x84] sm:$0xf]
    %v84 = vld [vmem:[#allocation5 + $0x88] sm:$0xf]
    %v85 = vld [vmem:[#allocation5 + $0x8c] sm:$0xf]
    %v86 = vld [vmem:[#allocation5 + $0x90] sm:$0xf]
    %v87 = vld [vmem:[#allocation5 + $0x94] sm:$0xf]
    %v88 = vld [vmem:[#allocation5 + $0x98] sm:$0xf]
    %v89 = vld [vmem:[#allocation5 + $0x9c] sm:$0xf]
    %v90 = vld [vmem:[#allocation5 + $0xa0] sm:$0xf]
    %v91 = vld [vmem:[#allocation5 + $0xa4] sm:$0xf]
    %v92 = vld [vmem:[#allocation5 + $0xa8] sm:$0xf]
    %v93 = vld [vmem:[#allocation5 + $0xac] sm:$0xf]
    %v94 = vld [vmem:[#allocation5 + $0xb0] sm:$0xf]
    %v95 = vld [vmem:[#allocation5 + $0xb4] sm:$0xf]
    %v96 = vld [vmem:[#allocation5 + $0xb8] sm:$0xf]
    %v97 = vld [vmem:[#allocation5 + $0xbc] sm:$0xf]
    %v98 = vld [vmem:[#allocation5 + $0xc0] sm:$0xf]
    %v99 = vld [vmem:[#allocation5 + $0xc4] sm:$0xf]
    %v100 = vld [vmem:[#allocation5 + $0xc8] sm:$0xf]
    %v101 = vld [vmem:[#allocation5 + $0xcc] sm:$0xf]
    %v102 = vld [vmem:[#allocation5 + $0xd0] sm:$0xf]
    %v103 = vld [vmem:[#allocation5 + $0xd4] sm:$0xf]
    %v104 = vld [vmem:[#allocation5 + $0xd8] sm:$0xf]
    %v105 = vld [vmem:[#allocation5 + $0xdc] sm:$0xf]
    %v106 = vld [vmem:[#allocation5 + $0xe0] sm:$0xf]
    %v107 = vld [vmem:[#allocation5 + $0xe4] sm:$0xf]
    %v108 = vld [vmem:[#allocation5 + $0xe8] sm:$0xf]
    %v109 = vld [vmem:[#allocation5 + $0xec] sm:$0xf]
    %v110 = vld [vmem:[#allocation5 + $0xf0] sm:$0xf]
    %v111 = vld [vmem:[#allocation5 + $0xf4] sm:$0xf]
    %v112 = vld [vmem:[#allocation5 + $0xf8] sm:$0xf]
    %v113 = vld [vmem:[#allocation5 + $0xfc] sm:$0xf]
    %v114 = vld [vmem:[%s2] sm:$0x1]
    %v116 = vlaneseq
    %v117 = vshrl.u32 %v116, 7
    %v118 = vsub.s32 0, %v117
    %v119 = vrot.slane %v114, %v118
    %v123 = vunpack.c.l.b16 %v48
    %v124 = vunpack.c.h.b16 %v48
    %v125 = vunpack.c.l.b16 %v49
    %v126 = vunpack.c.h.b16 %v49
    %v127 = vpack.c.b16 %v123, %v123
    %v128 = vpack.c.b16 %v124, %v124
    %v129 = vpack.c.b16 %v125, %v125
    %v130 = vpack.c.b16 %v126, %v126
    %v199 = vunpack.c.l.b16 %v50
    %v200 = vunpack.c.l.b16 %v51
    %v201 = vunpack.c.l.b16 %v52
    %v202 = vunpack.c.l.b16 %v53
    %v203 = vunpack.c.l.b16 %v54
    %v204 = vunpack.c.l.b16 %v55
    %v205 = vunpack.c.l.b16 %v56
    %v206 = vunpack.c.l.b16 %v57
    %v207 = vunpack.c.l.b16 %v58
    %v208 = vunpack.c.l.b16 %v59
    %v209 = vunpack.c.l.b16 %v60
    %v210 = vunpack.c.l.b16 %v61
    %v211 = vunpack.c.l.b16 %v62
    %v212 = vunpack.c.l.b16 %v63
    %v213 = vunpack.c.l.b16 %v64
    %v214 = vunpack.c.l.b16 %v65
    %v215 = vunpack.c.l.b16 %v66
    %v216 = vunpack.c.l.b16 %v67
    %v217 = vunpack.c.l.b16 %v68
    %v218 = vunpack.c.l.b16 %v69
    %v219 = vunpack.c.l.b16 %v70
    %v220 = vunpack.c.l.b16 %v71
    %v221 = vunpack.c.l.b16 %v72
    %v222 = vunpack.c.l.b16 %v73
    %v223 = vunpack.c.l.b16 %v74
    %v224 = vunpack.c.l.b16 %v75
    %v225 = vunpack.c.l.b16 %v76
    %v226 = vunpack.c.l.b16 %v77
    %v227 = vunpack.c.l.b16 %v78
    %v228 = vunpack.c.l.b16 %v79
    %v229 = vunpack.c.l.b16 %v80
    %v230 = vunpack.c.l.b16 %v81
    %v231 = vunpack.c.l.b16 %v82
    %v232 = vunpack.c.l.b16 %v83
    %v233 = vunpack.c.l.b16 %v84
    %v234 = vunpack.c.l.b16 %v85
    %v235 = vunpack.c.l.b16 %v86
    %v236 = vunpack.c.l.b16 %v87
    %v237 = vunpack.c.l.b16 %v88
    %v238 = vunpack.c.l.b16 %v89
    %v239 = vunpack.c.l.b16 %v90
    %v240 = vunpack.c.l.b16 %v91
    %v241 = vunpack.c.l.b16 %v92
    %v242 = vunpack.c.l.b16 %v93
    %v243 = vunpack.c.l.b16 %v94
    %v244 = vunpack.c.l.b16 %v95
    %v245 = vunpack.c.l.b16 %v96
    %v246 = vunpack.c.l.b16 %v97
    %v247 = vunpack.c.l.b16 %v98
    %v248 = vunpack.c.l.b16 %v99
    %v249 = vunpack.c.l.b16 %v100
    %v250 = vunpack.c.l.b16 %v101
    %v251 = vunpack.c.l.b16 %v102
    %v252 = vunpack.c.l.b16 %v103
    %v253 = vunpack.c.l.b16 %v104
    %v254 = vunpack.c.l.b16 %v105
    %v255 = vunpack.c.l.b16 %v106
    %v256 = vunpack.c.l.b16 %v107
    %v257 = vunpack.c.l.b16 %v108
    %v258 = vunpack.c.l.b16 %v109
    %v259 = vunpack.c.l.b16 %v110
    %v260 = vunpack.c.l.b16 %v111
    %v261 = vunpack.c.l.b16 %v112
    %v262 = vunpack.c.l.b16 %v113
    %v263 = vpack.c.b16 %v200, %v199
    %v264 = vpack.c.b16 %v202, %v201
    %v265 = vpack.c.b16 %v204, %v203
    %v266 = vpack.c.b16 %v206, %v205
    %v267 = vpack.c.b16 %v208, %v207
    %v268 = vpack.c.b16 %v210, %v209
    %v269 = vpack.c.b16 %v212, %v211
    %v270 = vpack.c.b16 %v214, %v213
    %v271 = vpack.c.b16 %v216, %v215
    %v272 = vpack.c.b16 %v218, %v217
    %v273 = vpack.c.b16 %v220, %v219
    %v274 = vpack.c.b16 %v222, %v221
    %v275 = vpack.c.b16 %v224, %v223
    %v276 = vpack.c.b16 %v226, %v225
    %v277 = vpack.c.b16 %v228, %v227
    %v278 = vpack.c.b16 %v230, %v229
    %v279 = vpack.c.b16 %v232, %v231
    %v280 = vpack.c.b16 %v234, %v233
    %v281 = vpack.c.b16 %v236, %v235
    %v282 = vpack.c.b16 %v238, %v237
    %v283 = vpack.c.b16 %v240, %v239
    %v284 = vpack.c.b16 %v242, %v241
    %v285 = vpack.c.b16 %v244, %v243
    %v286 = vpack.c.b16 %v246, %v245
    %v287 = vpack.c.b16 %v248, %v247
    %v288 = vpack.c.b16 %v250, %v249
    %v289 = vpack.c.b16 %v252, %v251
    %v290 = vpack.c.b16 %v254, %v253
    %v291 = vpack.c.b16 %v256, %v255
    %v292 = vpack.c.b16 %v258, %v257
    %v293 = vpack.c.b16 %v260, %v259
    %v294 = vpack.c.b16 %v262, %v261
    %327 = vmatprep.subr.bf16.mxu0 0
    %328 = vmatpush1.bf16.msra.mxu0 %v263
    %329 = vmatprep.subr.bf16.mxu0 0
    %330 = vmatpush1.bf16.msra.mxu0 %v264
    %331 = vmatprep.subr.bf16.mxu0 0
    %332 = vmatpush1.bf16.msra.mxu0 %v265
    %333 = vmatprep.subr.bf16.mxu0 0
    %334 = vmatpush1.bf16.msra.mxu0 %v266
    %335 = vmatprep.subr.bf16.mxu0 0
    %336 = vmatpush1.bf16.msra.mxu0 %v267
    %337 = vmatprep.subr.bf16.mxu0 0
    %338 = vmatpush1.bf16.msra.mxu0 %v268
    %339 = vmatprep.subr.bf16.mxu0 0
    %340 = vmatpush1.bf16.msra.mxu0 %v269
    %341 = vmatprep.subr.bf16.mxu0 0
    %342 = vmatpush1.bf16.msra.mxu0 %v270
    %343 = vmatprep.subr.bf16.mxu0 0
    %344 = vmatpush1.bf16.msra.mxu0 %v271
    %345 = vmatprep.subr.bf16.mxu0 0
    %346 = vmatpush1.bf16.msra.mxu0 %v272
    %347 = vmatprep.subr.bf16.mxu0 0
    %348 = vmatpush1.bf16.msra.mxu0 %v273
    %349 = vmatprep.subr.bf16.mxu0 0
    %350 = vmatpush1.bf16.msra.mxu0 %v274
    %351 = vmatprep.subr.bf16.mxu0 0
    %352 = vmatpush1.bf16.msra.mxu0 %v275
    %353 = vmatprep.subr.bf16.mxu0 0
    %354 = vmatpush1.bf16.msra.mxu0 %v276
    %355 = vmatprep.subr.bf16.mxu0 0
    %356 = vmatpush1.bf16.msra.mxu0 %v277
    %357 = vmatprep.subr.bf16.mxu0 0
    %358 = vmatpush1.bf16.msra.mxu0 %v278
    %359 = vmatprep.mubr.bf16.mxu0 %v128
    %360 = vmatmul.mubr.bf16.gmra.mrb[0].mxu0 %v127
    %v361 = vpop.f32.mrb[0].mxu0
    %v362 = vadd.f32 %v119, %v361
    %v363 = vpop.f32.mrb[0].mxu0
    %v364 = vpop.f32.mrb[0].mxu0
    %v365 = vpop.f32.mrb[0].mxu0
    %366 = vdwg.mxu0
    %367 = vmatprep.subr.bf16.mxu0 0
    %368 = vmatpush1.bf16.msra.mxu0 %v279
    %369 = vmatprep.subr.bf16.mxu0 0
    %370 = vmatpush1.bf16.msra.mxu0 %v280
    %371 = vmatprep.subr.bf16.mxu0 0
    %372 = vmatpush1.bf16.msra.mxu0 %v281
    %373 = vmatprep.subr.bf16.mxu0 0
    %374 = vmatpush1.bf16.msra.mxu0 %v282
    %375 = vmatprep.subr.bf16.mxu0 0
    %376 = vmatpush1.bf16.msra.mxu0 %v283
    %377 = vmatprep.subr.bf16.mxu0 0
    %378 = vmatpush1.bf16.msra.mxu0 %v284
    %379 = vmatprep.subr.bf16.mxu0 0
    %380 = vmatpush1.bf16.msra.mxu0 %v285
    %381 = vmatprep.subr.bf16.mxu0 0
    %382 = vmatpush1.bf16.msra.mxu0 %v286
    %383 = vmatprep.subr.bf16.mxu0 0
    %384 = vmatpush1.bf16.msra.mxu0 %v287
    %385 = vmatprep.subr.bf16.mxu0 0
    %386 = vmatpush1.bf16.msra.mxu0 %v288
    %387 = vmatprep.subr.bf16.mxu0 0
    %388 = vmatpush1.bf16.msra.mxu0 %v289
    %389 = vmatprep.subr.bf16.mxu0 0
    %390 = vmatpush1.bf16.msra.mxu0 %v290
    %391 = vmatprep.subr.bf16.mxu0 0
    %392 = vmatpush1.bf16.msra.mxu0 %v291
    %393 = vmatprep.subr.bf16.mxu0 0
    %394 = vmatpush1.bf16.msra.mxu0 %v292
    %395 = vmatprep.subr.bf16.mxu0 0
    %396 = vmatpush1.bf16.msra.mxu0 %v293
    %397 = vmatprep.subr.bf16.mxu0 0
    %398 = vmatpush1.bf16.msra.mxu0 %v294
    %399 = vmatprep.mubr.bf16.mxu0 %v130
    %400 = vmatmul.mubr.bf16.gmra.mrb[0].mxu0 %v129
    %v401 = vpop.f32.mrb[0].mxu0
    %v402 = vadd.f32 %v362, %v401
    %v403 = vpop.f32.mrb[0].mxu0
    %v404 = vpop.f32.mrb[0].mxu0
    %v405 = vpop.f32.mrb[0].mxu0
    %406 = vdwg.mxu0
    %v407 = vmax.f32 %v402, 0.0
    %v408 = vld [vmem:[%s3] sm:$0x1]
    %v410 = vlaneseq
    %v411 = vshrl.u32 %v410, 7
    %v412 = vsub.s32 0, %v411
    %v413 = vrot.slane %v408, %v412
    %v415 = vmul.f32 %v407, %v413
    %416 = vadd.xlane.f32.xlu0 %v415
    %v417 = vpop.xlane.xlu0 %416
    %s418 = sld [smem:[#allocation2]]
    %v419 = vstv %s418
    %v420 = vadd.f32 %v417, %v419
    %v421 = vxor.u32 %v420, 2147483648
    %v422 = vmul.f32 %v421, 1.442695
    %v423 = vpow.pop %v422
    %v424 = vadd.f32 %v423, 1.0
    %v425 = vrcp.pop %v424
    %v426 = vmul.f32 1.0, %v425
    %vm427 = vcmask 7168
    %428 = vst.msk [vmem:[%s5] sm:$0xff] %vm427, %v426
    // Predicated region
    $region30: #{tpu_custom_call.1} parent=1 // pred_check
      _
    $region31: #{tpu_custom_call.1} parent=1 // pred_check_branch
      %430 = sbr.rel (0) target = $region33
    $region32: #{tpu_custom_call.1} parent=1 // pred_region
      _
    $region33: #{tpu_custom_call.1} parent=1 // pred_fallthru
      _
    // Predicated region
    $region34: #{tpu_custom_call.1} parent=1 // pred_check
      _
    $region35: #{tpu_custom_call.1} parent=1 // pred_check_branch
      %432 = sbr.rel (0) target = $region37
    $region36: #{tpu_custom_call.1} parent=1 // pred_region
      _
    $region37: #{tpu_custom_call.1} parent=1 // pred_fallthru
      _
    %433 = vsyncpa [#allocation4], 1
    %434 = vsyncpa [#allocation6], 1

</llo_original>
